<compile_context>
chip_gen: v5e
topology: v5e:2x2
jax: 0.10.0
libtpu: 0.0.40
codegen_flags: <defaults>
</compile_context>

<pallas_src>
import functools

import jax
import jax.numpy as jnp
from jax import lax
from jax.experimental import pallas as pl
from jax.experimental.pallas import tpu as pltpu
import numpy as np


def _grid_sample_kernel(x_ref, g_ref, o_ref, *, C: int, H: int, W: int):
    # x_ref: (1, C*H, W)  image slab (rows (c,h) on sublanes, w on lanes)
    # g_ref: (1, 2, TP)   sampling coords (x; y) for this output-pixel tile
    # o_ref: (1, C, TP)   output tile (lane-dense: P on lanes)
    img = x_ref[0]                                   # (C*H, W)
    g = g_ref[0].astype(jnp.float32)                 # (2, TP)
    tp = g.shape[1]
    gx = g[0:1, :]                                   # (1, TP)
    gy = g[1:2, :]                                   # (1, TP)

    # align_corners=False unnormalization; padding_mode='border' -> clamp.
    ix = jnp.clip(((gx + 1.0) * W - 1.0) * 0.5, 0.0, float(W - 1))   # (1, TP)
    iy = jnp.clip(((gy + 1.0) * H - 1.0) * 0.5, 0.0, float(H - 1))   # (1, TP)
    # TODO(synk): padding_mode='zeros'/'reflection' and mode='nearest' not implemented.

    # Separable "tent" bilinear weights (exact under border clamping: the
    # clamped duplicate corner's bilinear weight is exactly 0).
    col = lax.broadcasted_iota(jnp.int32, (W, tp), 0).astype(jnp.float32)
    row = lax.broadcasted_iota(jnp.int32, (H, tp), 0).astype(jnp.float32)
    tx = jnp.maximum(1.0 - jnp.abs(ix - col), 0.0)   # (W, TP)
    ty = jnp.maximum(1.0 - jnp.abs(iy - row), 0.0)   # (H, TP)

    # Stage 1 (MXU): contract over W with M = C*H (keeps the MXU well fed).
    if img.dtype == jnp.bfloat16:
        a = jnp.dot(img, tx.astype(jnp.bfloat16),
                    preferred_element_type=jnp.float32)
    else:
        a = jnp.dot(img.astype(jnp.float32), tx,
                    preferred_element_type=jnp.float32)
    # a: (C*H, TP) f32

    # Stage 2 (VPU/XLU): row-weighted reduce over H.
    out = jnp.sum(a.reshape(C, H, tp) * ty[None, :, :], axis=1)     # (C, TP)
    o_ref[0] = out.astype(o_ref.dtype)


def _round_up(x: int, m: int) -> int:
    return ((x + m - 1) // m) * m


def warp(inputs: jax.Array, grid: jax.Array, padding_mode: str = "border",
         *, tp_max: int = 512) -> jax.Array:
    """Pallas grid_sample. inputs: (N,C,H,W), grid: (N,Ho,Wo,2) -> (N,C,Ho,Wo)."""
    assert padding_mode == "border", "only padding_mode='border' is implemented"
    N, C, H, W = inputs.shape
    Ng, Ho, Wo, two = grid.shape
    assert two == 2 and Ng == N
    P = Ho * Wo

    # Output-pixel tile: 128-aligned, bounded; pad P so we never fall back to
    # a huge full-extent tile and every store stays lane-dense.
    TP = min(_round_up(tp_max, 128), _round_up(P, 128))
    # v7x has 2 TensorCores: if N == 1, split the P axis so both get work.
    if N == 1 and _round_up(P, TP) // TP < 2 and TP > 128:
        TP = max(128, _round_up(pl.cdiv(P, 2), 128))
    P_pad = _round_up(P, TP)

    # Layout glue (cheap XLA ops, outside the kernel).
    # TODO(synk): images whose (C*H, W) slab exceeds VMEM would need an extra
    # H-band contraction axis; not needed at these sizes.
    x_flat = inputs.reshape(N, C * H, W)
    g = jnp.transpose(grid.reshape(N, P, 2), (0, 2, 1)).astype(jnp.float32)
    if P_pad != P:
        g = jnp.pad(g, ((0, 0), (0, 0), (0, P_pad - P)))

    out = pl.pallas_call(
        functools.partial(_grid_sample_kernel, C=C, H=H, W=W),
        out_shape=jax.ShapeDtypeStruct((N, C, P_pad), inputs.dtype),
        grid_spec=pltpu.PrefetchScalarGridSpec(
            num_scalar_prefetch=0,
            grid=(N, P_pad // TP),
            in_specs=[
                # Image slab: block index constant over p -> DMA'd once per n.
                pl.BlockSpec((1, C * H, W), lambda n, p: (n, 0, 0)),
                pl.BlockSpec((1, 2, TP), lambda n, p: (n, 0, p)),
            ],
            out_specs=pl.BlockSpec((1, C, TP), lambda n, p: (n, 0, p)),
        ),
        compiler_params=pltpu.CompilerParams(
            dimension_semantics=("parallel", "parallel"),
            vmem_limit_bytes=48 * 1024 * 1024),
    )(x_flat, g)

    return out[:, :, :P].reshape(N, C, Ho, Wo)


def warp_reference(inputs, grid):
    """Pure-JAX reference of F.grid_sample(bilinear, border, align_corners=False)."""
    N, C, H, W = inputs.shape
    _, Ho, Wo, _ = grid.shape
    gx = grid[..., 0]
    gy = grid[..., 1]
    ix = jnp.clip(((gx + 1.0) * W - 1.0) * 0.5, 0.0, W - 1.0)
    iy = jnp.clip(((gy + 1.0) * H - 1.0) * 0.5, 0.0, H - 1.0)
    x0 = jnp.floor(ix)
    y0 = jnp.floor(iy)
    wx1 = ix - x0
    wx0 = 1.0 - wx1
    wy1 = iy - y0
    wy0 = 1.0 - wy1
    x0i = jnp.clip(x0, 0, W - 1).astype(jnp.int32)
    x1i = jnp.clip(x0 + 1, 0, W - 1).astype(jnp.int32)
    y0i = jnp.clip(y0, 0, H - 1).astype(jnp.int32)
    y1i = jnp.clip(y0 + 1, 0, H - 1).astype(jnp.int32)

    flat = inputs.reshape(N, C, H * W)

    def gather(yi, xi):
        idx = (yi * W + xi).reshape(N, 1, Ho * Wo)
        return jnp.take_along_axis(flat, idx, axis=2).reshape(N, C, Ho, Wo)

    def bw(w):
        return w[:, None, :, :]

    return (gather(y0i, x0i) * bw(wy0 * wx0)
            + gather(y0i, x1i) * bw(wy0 * wx1)
            + gather(y1i, x0i) * bw(wy1 * wx0)
            + gather(y1i, x1i) * bw(wy1 * wx1))


if __name__ == "__main__":
    key = jax.random.PRNGKey(0)
    k1, k2, k3, k4 = jax.random.split(key, 4)

    # Test 1: batch=2, channels=4, 16x16 image, 8x8 sampling grid.
    inputs = jax.random.normal(k1, (2, 4, 16, 16), dtype=jnp.float32)
    # grid slightly outside [-1, 1] to exercise border padding
    grid = jax.random.uniform(k2, (2, 8, 8, 2), dtype=jnp.float32,
                              minval=-1.1, maxval=1.1)
    out = jax.block_until_ready(warp(inputs, grid))
    ref = warp_reference(inputs, grid)
    np.testing.assert_allclose(np.asarray(out), np.asarray(ref),
                               rtol=1e-5, atol=1e-5)

    # Test 2: batch=1, C=3, odd output-pixel count (exercises P padding and
    # the N == 1 tile-splitting path).
    inputs2 = jax.random.normal(k3, (1, 3, 16, 16), dtype=jnp.float32)
    grid2 = jax.random.uniform(k4, (1, 7, 9, 2), dtype=jnp.float32,
                               minval=-1.1, maxval=1.1)
    out2 = jax.block_until_ready(warp(inputs2, grid2))
    ref2 = warp_reference(inputs2, grid2)
    np.testing.assert_allclose(np.asarray(out2), np.asarray(ref2),
                               rtol=1e-5, atol=1e-5)

    print("KERNEL_OK")
</pallas_src>

<mosaic_0001>
module attributes {stable_mosaic.version = 11 : i64} {
  func.func @_grid_sample_kernel(%arg0: i32, %arg1: i32, %arg2: memref<1x64x16xf32, #tpu.memory_space<vmem>>, %arg3: memref<1x2x128xf32, #tpu.memory_space<vmem>>, %arg4: memref<1x4x128xf32, #tpu.memory_space<vmem>>) attributes {dimension_semantics = [#tpu.dimension_semantics<parallel>, #tpu.dimension_semantics<parallel>], iteration_bounds = array<i64: 2, 1>, scalar_prefetch = 0 : i64, scratch_operands = 0 : i64, tpu.core_type = #tpu.core_type<tc>, window_params = [{transform_indices = @transform_0, window_bounds = array<i64: 1, 64, 16>}, {transform_indices = @transform_1, window_bounds = array<i64: 1, 2, 128>}, {transform_indices = @transform_2, window_bounds = array<i64: 1, 4, 128>}]} {
    %c0 = arith.constant 0 : index
    %c0_0 = arith.constant 0 : index
    %c0_1 = arith.constant 0 : index
    %0 = vector.load %arg2[%c0, %c0_0, %c0_1] : memref<1x64x16xf32, #tpu.memory_space<vmem>>, vector<1x64x16xf32>
    %1 = vector.shape_cast %0 : vector<1x64x16xf32> to vector<64x16xf32>
    %c0_2 = arith.constant 0 : index
    %c0_3 = arith.constant 0 : index
    %c0_4 = arith.constant 0 : index
    %2 = vector.load %arg3[%c0_2, %c0_3, %c0_4] : memref<1x2x128xf32, #tpu.memory_space<vmem>>, vector<1x2x128xf32>
    %3 = vector.shape_cast %2 : vector<1x2x128xf32> to vector<2x128xf32>
    %4 = vector.extract_strided_slice %3 {offsets = [0, 0], sizes = [1, 128], strides = [1, 1]} : vector<2x128xf32> to vector<1x128xf32>
    %5 = vector.extract_strided_slice %3 {offsets = [1, 0], sizes = [1, 128], strides = [1, 1]} : vector<2x128xf32> to vector<1x128xf32>
    %cst = arith.constant 1.000000e+00 : f32
    %6 = vector.broadcast %cst : f32 to vector<1x128xf32>
    %7 = arith.addf %4, %6 : vector<1x128xf32>
    %cst_5 = arith.constant 1.600000e+01 : f32
    %8 = vector.broadcast %cst_5 : f32 to vector<1x128xf32>
    %9 = arith.mulf %7, %8 : vector<1x128xf32>
    %cst_6 = arith.constant 1.000000e+00 : f32
    %10 = vector.broadcast %cst_6 : f32 to vector<1x128xf32>
    %11 = arith.subf %9, %10 : vector<1x128xf32>
    %cst_7 = arith.constant 5.000000e-01 : f32
    %12 = vector.broadcast %cst_7 : f32 to vector<1x128xf32>
    %13 = arith.mulf %11, %12 : vector<1x128xf32>
    %cst_8 = arith.constant 0.000000e+00 : f32
    %cst_9 = arith.constant 1.500000e+01 : f32
    %14 = vector.broadcast %cst_8 : f32 to vector<1x128xf32>
    %15 = arith.maximumf %14, %13 : vector<1x128xf32>
    %16 = vector.broadcast %cst_9 : f32 to vector<1x128xf32>
    %17 = arith.minimumf %16, %15 : vector<1x128xf32>
    %cst_10 = arith.constant 1.000000e+00 : f32
    %18 = vector.broadcast %cst_10 : f32 to vector<1x128xf32>
    %19 = arith.addf %5, %18 : vector<1x128xf32>
    %cst_11 = arith.constant 1.600000e+01 : f32
    %20 = vector.broadcast %cst_11 : f32 to vector<1x128xf32>
    %21 = arith.mulf %19, %20 : vector<1x128xf32>
    %cst_12 = arith.constant 1.000000e+00 : f32
    %22 = vector.broadcast %cst_12 : f32 to vector<1x128xf32>
    %23 = arith.subf %21, %22 : vector<1x128xf32>
    %cst_13 = arith.constant 5.000000e-01 : f32
    %24 = vector.broadcast %cst_13 : f32 to vector<1x128xf32>
    %25 = arith.mulf %23, %24 : vector<1x128xf32>
    %cst_14 = arith.constant 0.000000e+00 : f32
    %cst_15 = arith.constant 1.500000e+01 : f32
    %26 = vector.broadcast %cst_14 : f32 to vector<1x128xf32>
    %27 = arith.maximumf %26, %25 : vector<1x128xf32>
    %28 = vector.broadcast %cst_15 : f32 to vector<1x128xf32>
    %29 = arith.minimumf %28, %27 : vector<1x128xf32>
    %30 = tpu.iota {dimensions = array<i32: 0>} : vector<16x128xi32>
    %31 = arith.sitofp %30 : vector<16x128xi32> to vector<16x128xf32>
    %32 = tpu.iota {dimensions = array<i32: 0>} : vector<16x128xi32>
    %33 = arith.sitofp %32 : vector<16x128xi32> to vector<16x128xf32>
    %34 = vector.broadcast %17 : vector<1x128xf32> to vector<16x128xf32>
    %35 = arith.subf %34, %31 : vector<16x128xf32>
    %36 = math.absf %35 : vector<16x128xf32>
    %cst_16 = arith.constant 1.000000e+00 : f32
    %37 = vector.broadcast %cst_16 : f32 to vector<16x128xf32>
    %38 = arith.subf %37, %36 : vector<16x128xf32>
    %cst_17 = arith.constant 0.000000e+00 : f32
    %39 = vector.broadcast %cst_17 : f32 to vector<16x128xf32>
    %40 = arith.maximumf %38, %39 : vector<16x128xf32>
    %41 = vector.broadcast %29 : vector<1x128xf32> to vector<16x128xf32>
    %42 = arith.subf %41, %33 : vector<16x128xf32>
    %43 = math.absf %42 : vector<16x128xf32>
    %cst_18 = arith.constant 1.000000e+00 : f32
    %44 = vector.broadcast %cst_18 : f32 to vector<16x128xf32>
    %45 = arith.subf %44, %43 : vector<16x128xf32>
    %cst_19 = arith.constant 0.000000e+00 : f32
    %46 = vector.broadcast %cst_19 : f32 to vector<16x128xf32>
    %47 = arith.maximumf %45, %46 : vector<16x128xf32>
    %cst_20 = arith.constant dense<0.000000e+00> : vector<64x128xf32>
    %48 = tpu.matmul %1, %40, %cst_20 {dimension_numbers = #tpu.dot_dimension_numbers<[1], [0], [0], [1], [0, 0, 1, 1], [], []>} : vector<64x16xf32>, vector<16x128xf32>, vector<64x128xf32> -> vector<64x128xf32>
    %49 = vector.shape_cast %48 : vector<64x128xf32> to vector<4x16x128xf32>
    %50 = vector.shape_cast %47 : vector<16x128xf32> to vector<1x16x128xf32>
    %51 = vector.broadcast %50 : vector<1x16x128xf32> to vector<4x16x128xf32>
    %52 = arith.mulf %49, %51 : vector<4x16x128xf32>
    %cst_21 = arith.constant dense<0.000000e+00> : vector<4x128xf32>
    %53 = vector.multi_reduction <add>, %52, %cst_21 [1] : vector<4x16x128xf32> to vector<4x128xf32>
    %c0_22 = arith.constant 0 : index
    %c0_23 = arith.constant 0 : index
    %c0_24 = arith.constant 0 : index
    %54 = vector.load %arg4[%c0_22, %c0_23, %c0_24] : memref<1x4x128xf32, #tpu.memory_space<vmem>>, vector<1x4x128xf32>
    %55 = vector.shape_cast %54 : vector<1x4x128xf32> to vector<4x128xf32>
    %56 = vector.shape_cast %53 : vector<4x128xf32> to vector<1x4x128xf32>
    tpu.vector_store %arg4[%c0_22, %c0_23, %c0_24], %56 {strides = array<i32>} : memref<1x4x128xf32, #tpu.memory_space<vmem>>, vector<1x4x128xf32>,
    return
  }
  func.func @transform_0(%arg0: i32, %arg1: i32) -> (i32, i32, i32) {
    %c0_i32 = arith.constant 0 : i32
    %c0_i32_0 = arith.constant 0 : i32
    %c0_i32_1 = arith.constant 0 : i32
    return %arg0, %c0_i32, %c0_i32_0 : i32, i32, i32
  }
  func.func @transform_1(%arg0: i32, %arg1: i32) -> (i32, i32, i32) {
    %c0_i32 = arith.constant 0 : i32
    %c0_i32_0 = arith.constant 0 : i32
    return %arg0, %c0_i32, %arg1 : i32, i32, i32
  }
  func.func @transform_2(%arg0: i32, %arg1: i32) -> (i32, i32, i32) {
    %c0_i32 = arith.constant 0 : i32
    %c0_i32_0 = arith.constant 0 : i32
    return %arg0, %c0_i32, %arg1 : i32, i32, i32
  }
}

</mosaic_0001>

<llo_original>
// kernel: tpu_custom_call.1
$region0: #{tpu_custom_call.1}
  #allocation0 [shape = 'u32[]', space=smem, size = 0x4, offset = 0x4, fixed_abs, tag = 'smem constant byte address 0x4 - core index']
  #allocation1 [shape = 'u32[72,128]{1,0:T(1,128)}', space=vmem, size = 0x9000, scoped, tag = 'internal scratch']
  %s0 = inlined_call_operand.vmem [shape: f32[2,64,16], index: 0, kind: input, shape index: {}]
  %s1 = inlined_call_operand.vmem [shape: f32[2,2,128], index: 1, kind: input, shape index: {}]
  %s2 = inlined_call_operand.hbm [shape: f32[2,4,128], index: 2, kind: output, shape index: {}]
  %s3 = sld [smem:[#allocation0]]
  $region41: #{tpu_custom_call.1} parent=0
    _
  %s5 = ssub.s32 1, %s3
  %s6 = scalar_select 0, %s5, %s3
  $region1: #{tpu_custom_call.1} parent=0
    #allocation2 [shape = 'u8[4096]{0}', space=vmem, size = 0x1000, scoped, tag = 'output window, operand 0']
    #allocation3 [shape = 's32[2]{0}', space=sflag, size = 0x8, scoped, tag = 'scoped memory for tpu_custom_call.1']
    %7 = vsyncpa [#allocation3], 0
    %s8 = scalar_lea.sflag [#allocation3], 1
    %9 = vsyncpa %s8, 0
    loop: start=0, step=1, limit=4
    $region2: #{tpu_custom_call.1} parent=1 // loop_pre_header
      _
    $region3: #{tpu_custom_call.1} parent=1 // loop_header
      %s11 = sphi 0, %s15
      %p12 = scmp.ge.s32.totalorder %s11, 4
      %s18 = sphi 0, %s30
      %s19 = sphi 0, %s26
      %s20 = sphi 0, %s18
      %s21 = sphi 0, %s19
      %s22 = sphi 0, %s20
      %s23 = sphi 0, %s21
      %s33 = sphi 0, %s35
      %s36 = sphi 0, %s33
      %s37 = sphi 0, %s36
      %s53 = sphi 0, %s37
      %s61 = sphi 0, %s63
      %s64 = sphi 0, %s61
      %s65 = sphi 0, %s64
      %s81 = sphi 0, %s65
      %s89 = sphi 0, %s91
      %s92 = sphi 0, %s89
      %s93 = sphi 0, %s92
      %s109 = sphi 0, %s93
    $region4: #{tpu_custom_call.1} parent=1 // loop_header_branch
      %14 = sbr.rel (%p12) target = $region8
    $region5: #{tpu_custom_call.1} parent=1 // loop_body
      %s16 = ssub.s32 %s11, 1
      %s17 = ssub.s32 %s11, 2
      %s24 = sadd.s32 1, %s19
      %p25 = scmp.ge.s32.totalorder %s24, 1
      %s26 = scalar_select %p25, 0, %s24
      %s27 = sadd.s32 1, %s18
      %s28 = scalar_select %p25, %s27, %s18
      %p29 = scmp.ge.s32.totalorder %s28, 2
      %s30 = scalar_select %p29, 0, %s28
      %s31 = ssub.s32 %s18, %s30
      %p32 = scmp.eq.s32.totalorder %s31, 0
      %s34 = sadd.s32 %s33, 1
      %s35 = scalar_select %p32, %s33, %s34
      %p38 = pneg %p32
      %p39 = scmp.eq.s32.totalorder %s11, 1
      %p40 = por %p38, %p39
      %p41 = scmp.ne.s32.totalorder %s33, %s36
      %p42 = scmp.eq.s32.totalorder %s11, 0
      %p43 = por %p41, %p42
      %p44 = scmp.ne.s32.totalorder %s33, %s36
      %p45 = scmp.eq.s32.totalorder %s16, 1
      %p46 = por %p44, %p45
      %p47 = scmp.ne.s32.totalorder %s36, %s37
      %p48 = scmp.eq.s32.totalorder %s16, 0
      %p49 = por %p47, %p48
      %p50 = scmp.ne.s32.totalorder %s36, %s37
      %p51 = scmp.eq.s32.totalorder %s17, 1
      %p52 = por %p50, %p51
      %p54 = scmp.ne.s32.totalorder %s37, %s53
      %p55 = scmp.eq.s32.totalorder %s17, 0
      %p56 = por %p54, %p55
      %s57 = ssub.s32 %s18, %s30
      %s58 = ssub.s32 %s19, %s26
      %s59 = sor.u32 %s57, %s58
      %p60 = scmp.eq.s32.totalorder %s59, 0
      %s62 = sadd.s32 %s61, 1
      %s63 = scalar_select %p60, %s61, %s62
      %p66 = pneg %p60
      %p67 = scmp.eq.s32.totalorder %s11, 1
      %p68 = por %p66, %p67
      %p69 = scmp.ne.s32.totalorder %s61, %s64
      %p70 = scmp.eq.s32.totalorder %s11, 0
      %p71 = por %p69, %p70
      %p72 = scmp.ne.s32.totalorder %s61, %s64
      %p73 = scmp.eq.s32.totalorder %s16, 1
      %p74 = por %p72, %p73
      %p75 = scmp.ne.s32.totalorder %s64, %s65
      %p76 = scmp.eq.s32.totalorder %s16, 0
      %p77 = por %p75, %p76
      %p78 = scmp.ne.s32.totalorder %s64, %s65
      %p79 = scmp.eq.s32.totalorder %s17, 1
      %p80 = por %p78, %p79
      %p82 = scmp.ne.s32.totalorder %s65, %s81
      %p83 = scmp.eq.s32.totalorder %s17, 0
      %p84 = por %p82, %p83
      %s85 = ssub.s32 %s18, %s30
      %s86 = ssub.s32 %s19, %s26
      %s87 = sor.u32 %s85, %s86
      %p88 = scmp.eq.s32.totalorder %s87, 0
      %s90 = sadd.s32 %s89, 1
      %s91 = scalar_select %p88, %s89, %s90
      %p94 = pneg %p88
      %p95 = scmp.eq.s32.totalorder %s11, 1
      %p96 = por %p94, %p95
      %p97 = scmp.ne.s32.totalorder %s89, %s92
      %p98 = scmp.eq.s32.totalorder %s11, 0
      %p99 = por %p97, %p98
      %p100 = scmp.ne.s32.totalorder %s89, %s92
      %p101 = scmp.eq.s32.totalorder %s16, 1
      %p102 = por %p100, %p101
      %p103 = scmp.ne.s32.totalorder %s92, %s93
      %p104 = scmp.eq.s32.totalorder %s16, 0
      %p105 = por %p103, %p104
      %p106 = scmp.ne.s32.totalorder %s92, %s93
      %p107 = scmp.eq.s32.totalorder %s17, 1
      %p108 = por %p106, %p107
      %p110 = scmp.ne.s32.totalorder %s93, %s109
      %p111 = scmp.eq.s32.totalorder %s17, 0
      %p112 = por %p110, %p111
      %p113 = scmp.le.s32.totalorder 1, %s11
      %p114 = scmp.lt.s32.totalorder %s11, 3
      %p115 = pnand %p113, %p114
      %p116 = pneg %p115
      // Predicated region
      $region9: #{tpu_custom_call.1} parent=5 // pred_check
        _
      $region10: #{tpu_custom_call.1} parent=5 // pred_check_branch
        %118 = sbr.rel (%p115) target = $region12
      $region11: #{tpu_custom_call.1} parent=5 // pred_region
        %s119 = ssub.s32 %s11, 1
      $region12: #{tpu_custom_call.1} parent=5 // pred_fallthru
        _
      %p120 = scmp.lt.s32.totalorder %s11, 2
      // Predicated region
      $region13: #{tpu_custom_call.1} parent=5 // pred_check
        %p121 = pneg %p120
      $region14: #{tpu_custom_call.1} parent=5 // pred_check_branch
        %123 = sbr.rel (%p121) target = $region16
      $region15: #{tpu_custom_call.1} parent=5 // pred_region
        // Predicated region
        $region17: #{tpu_custom_call.1} parent=15 // pred_check
          %p124 = pneg %p43
        $region18: #{tpu_custom_call.1} parent=15 // pred_check_branch
          %126 = sbr.rel (%p124) target = $region20
        $region19: #{tpu_custom_call.1} parent=15 // pred_region
          %p127 = scmp.lt.s32.totalorder %s18, 1
          %s128 = scalar_select %p127, %s18, 1
          %s129 = smul.addr %s128, 8
          %s130 = smul.addr %s129, 8
          %s131 = scalar_lea.vmem %s0, %s130
        $region20: #{tpu_custom_call.1} parent=15 // pred_fallthru
          _
        // Predicated region
        $region21: #{tpu_custom_call.1} parent=15 // pred_check
          %p132 = pneg %p71
        $region22: #{tpu_custom_call.1} parent=15 // pred_check_branch
          %134 = sbr.rel (%p132) target = $region24
        $region23: #{tpu_custom_call.1} parent=15 // pred_region
          %p135 = scmp.lt.s32.totalorder %s18, 1
          %s136 = scalar_select %p135, %s18, 1
          %p137 = scmp.lt.s32.totalorder %s19, 0
          %s138 = scalar_select %p137, %s19, 0
          %s139 = sadd.s32 %s138, %s136
          %s140 = smul.addr %s139, 2
          %s141 = scalar_lea.vmem %s1, %s140
        $region24: #{tpu_custom_call.1} parent=15 // pred_fallthru
          _
      $region16: #{tpu_custom_call.1} parent=5 // pred_fallthru
        _
      %p142 = scmp.le.s32.totalorder 1, %s11
      %p143 = scmp.lt.s32.totalorder %s11, 3
      %p144 = pnand %p142, %p143
      %p145 = pneg %p144
      // Predicated region
      $region25: #{tpu_custom_call.1} parent=5 // pred_check
        _
      $region26: #{tpu_custom_call.1} parent=5 // pred_check_branch
        %147 = sbr.rel (%p144) target = $region28
      $region27: #{tpu_custom_call.1} parent=5 // pred_region
        %s148 = ssub.s32 %s11, 1
        %p149 = scmp.lt.s32.totalorder %s20, 1
        %s150 = scalar_select %p149, %s20, 1
        %s151 = smul.addr %s150, 8
        %s152 = smul.addr %s151, 8
        %s153 = scalar_lea.vmem %s0, %s152
        %p154 = pneg %p49
        %p155 = pneg %p46
        %p156 = scmp.lt.s32.totalorder %s20, 1
        %s157 = scalar_select %p156, %s20, 1
        %p158 = scmp.lt.s32.totalorder %s21, 0
        %s159 = scalar_select %p158, %s21, 0
        %s160 = sadd.s32 %s159, %s157
        %s161 = smul.addr %s160, 2
        %s162 = scalar_lea.vmem %s1, %s161
        %p163 = pneg %p77
        %p164 = pneg %p74
        %p165 = pneg %p105
        %p166 = pneg %p102
        %s167 = sand.u32 %s92, 1
        %s168 = scalar_lea.sflag [#allocation3], %s167
        %s169 = sand.u32 %s92, 1
        %s170 = smul.addr %s169, 4
        %s171 = scalar_lea.vmem [#allocation2], %s170
        %p172 = scmp.lt.s32.totalorder %s20, 1
        %s173 = scalar_select %p172, %s20, 1
        %s174 = smul.addr %s173, 8
        %s175 = smul.addr %s174, 8
        %s176 = scalar_lea.vmem %s0, %s175
        %p177 = scmp.lt.s32.totalorder %s20, 1
        %s178 = scalar_select %p177, %s20, 1
        %p179 = scmp.lt.s32.totalorder %s21, 0
        %s180 = scalar_select %p179, %s21, 0
        %s181 = sadd.s32 %s180, %s178
        %s182 = smul.addr %s181, 2
        %s183 = scalar_lea.vmem %s1, %s182
        %v184 = vld [vmem:[%s176] sm:$0xff]
        %v185 = vld [vmem:[%s176 + $0x8] sm:$0xff]
        %v186 = vld [vmem:[%s176 + $0x10] sm:$0xff]
        %v187 = vld [vmem:[%s176 + $0x18] sm:$0xff]
        %v188 = vld [vmem:[%s176 + $0x20] sm:$0xff]
        %v189 = vld [vmem:[%s176 + $0x28] sm:$0xff]
        %v190 = vld [vmem:[%s176 + $0x30] sm:$0xff]
        %v191 = vld [vmem:[%s176 + $0x38] sm:$0xff]
        %v192 = vld [vmem:[%s183] sm:$0x3]
        %v193 = vadd.f32 %v192, 1.0
        %v194 = vmul.f32 %v193, 16.0
        %v195 = vsub.f32 %v194, 1.0
        %v196 = vmul.f32 %v195, 0.5
        %v197 = vmax.f32 %v196, 0.0
        %v198 = vmin.f32 %v197, 15.0
        %v199 = vlaneseq
        %v200 = vshrl.u32 %v199, 7
        %v201 = vadd.s32 %v200, 8
        %v202 = vcvt.s32.f32 %v200
        %v203 = vcvt.s32.f32 %v201
        %v204 = vperm.slane %v198, 0
        %v205 = vsub.f32 %v204, %v202
        %v206 = vsub.f32 %v204, %v203
        %v207 = vand.u32 2147483647, %v205
        %v208 = vand.u32 2147483647, %v206
        %v209 = vsub.f32 1.0, %v207
        %v210 = vsub.f32 1.0, %v208
        %v211 = vmax.f32 %v209, 0.0
        %v212 = vmax.f32 %v210, 0.0
        %v213 = vperm.slane %v198, 1
        %v214 = vsub.f32 %v213, %v202
        %v215 = vsub.f32 %v213, %v203
        %v216 = vand.u32 2147483647, %v214
        %v217 = vand.u32 2147483647, %v215
        %v218 = vsub.f32 1.0, %v216
        %v219 = vsub.f32 1.0, %v217
        %v220 = vmax.f32 %v218, 0.0
        %v221 = vmax.f32 %v219, 0.0
        %vm222 = vcmask 130048
        %v224 = vsel %vm222, %v184, 0
        %v227 = vsel %vm222, %v185, 0
        %v230 = vsel %vm222, %v186, 0
        %v233 = vsel %vm222, %v187, 0
        %v236 = vsel %vm222, %v188, 0
        %v239 = vsel %vm222, %v189, 0
        %v242 = vsel %vm222, %v190, 0
        %v245 = vsel %vm222, %v191, 0
        %247 = vmatpush.msra.mxu0 0.0
        %248 = vmatpush.msra.mxu0 0.0
        %249 = vmatpush.msra.mxu0 0.0
        %250 = vmatpush.msra.mxu0 0.0
        %251 = vmatpush.msra.mxu0 0.0
        %252 = vmatpush.msra.mxu0 0.0
        %253 = vmatpush.msra.mxu0 0.0
        %254 = vmatpush.msra.mxu0 0.0
        %255 = vmatpush.msra.mxu0 0.0
        %256 = vmatpush.msra.mxu0 0.0
        %257 = vmatpush.msra.mxu0 0.0
        %258 = vmatpush.msra.mxu0 0.0
        %259 = vmatpush.msra.mxu0 0.0
        %260 = vmatpush.msra.mxu0 0.0
        %261 = vmatpush.msra.mxu0 %v212
        %262 = vmatpush.msra.mxu0 %v211
        %263 = vmatmul.f32.gmra.mxu0 %v224
        %v264 = vpop.f32.mrf.mxu0
        %v265 = vadd.f32 0.0, %v264
        %266 = vmatmul.f32.gmra.mxu0 %v227
        %v267 = vpop.f32.mrf.mxu0
        %v268 = vadd.f32 0.0, %v267
        %269 = vmatmul.f32.gmra.mxu0 %v230
        %v270 = vpop.f32.mrf.mxu0
        %v271 = vadd.f32 0.0, %v270
        %272 = vmatmul.f32.gmra.mxu0 %v233
        %v273 = vpop.f32.mrf.mxu0
        %v274 = vadd.f32 0.0, %v273
        %275 = vmatmul.f32.gmra.mxu0 %v236
        %v276 = vpop.f32.mrf.mxu0
        %v277 = vadd.f32 0.0, %v276
        %278 = vmatmul.f32.gmra.mxu0 %v239
        %v279 = vpop.f32.mrf.mxu0
        %v280 = vadd.f32 0.0, %v279
        %281 = vmatmul.f32.gmra.mxu0 %v242
        %v282 = vpop.f32.mrf.mxu0
        %v283 = vadd.f32 0.0, %v282
        %284 = vmatmul.f32.gmra.mxu0 %v245
        %v285 = vpop.f32.mrf.mxu0
        %v286 = vadd.f32 0.0, %v285
        %287 = vdwg.mxu0
        %v288 = vmul.f32 %v265, %v220
        %v289 = vmul.f32 %v268, %v221
        %v290 = vmul.f32 %v271, %v220
        %v291 = vmul.f32 %v274, %v221
        %v292 = vmul.f32 %v277, %v220
        %v293 = vmul.f32 %v280, %v221
        %v294 = vmul.f32 %v283, %v220
        %v295 = vmul.f32 %v286, %v221
        %v296 = vadd.f32 %v288, %v289
        %v297 = vrot.slane %v296, 4
        %v298 = vadd.f32 %v296, %v297
        %v299 = vrot.slane %v298, 2
        %v300 = vadd.f32 %v298, %v299
        %v301 = vrot.slane %v300, 1
        %v302 = vadd.f32 %v300, %v301
        %v303 = vadd.f32 %v290, %v291
        %v304 = vrot.slane %v303, 4
        %v305 = vadd.f32 %v303, %v304
        %v306 = vrot.slane %v305, 2
        %v307 = vadd.f32 %v305, %v306
        %v308 = vrot.slane %v307, 1
        %v309 = vadd.f32 %v307, %v308
        %v310 = vadd.f32 %v292, %v293
        %v311 = vrot.slane %v310, 4
        %v312 = vadd.f32 %v310, %v311
        %v313 = vrot.slane %v312, 2
        %v314 = vadd.f32 %v312, %v313
        %v315 = vrot.slane %v314, 1
        %v316 = vadd.f32 %v314, %v315
        %v317 = vadd.f32 %v294, %v295
        %v318 = vrot.slane %v317, 4
        %v319 = vadd.f32 %v317, %v318
        %v320 = vrot.slane %v319, 2
        %v321 = vadd.f32 %v319, %v320
        %v322 = vrot.slane %v321, 1
        %v323 = vadd.f32 %v321, %v322
        %vm328 = vcmask 1041409
        %v329 = vsel %vm328, %v309, %v302
        %vm330 = vcmask 1042434
        %v331 = vsel %vm330, %v316, %v329
        %vm332 = vcmask 1043459
        %v333 = vsel %vm332, %v323, %v331
        %335 = vst [vmem:[%s171] sm:$0xf] %v333
        %s336 = sand.u32 %s92, 1
        %s337 = scalar_lea.sflag [#allocation3], %s336
        %s338 = sand.u32 %s92, 1
        %s339 = smul.addr %s338, 4
        %s340 = scalar_lea.vmem [#allocation2], %s339
        // Predicated region
        $region29: #{tpu_custom_call.1} parent=27 // pred_check
          %p341 = pneg %p102
        $region30: #{tpu_custom_call.1} parent=27 // pred_check_branch
          %343 = sbr.rel (%p341) target = $region32
        $region31: #{tpu_custom_call.1} parent=27 // pred_region
          %345 = vsyncadd %s337, 0
          %s346 = sadd.s32 %s21, %s20
          %s347 = smul.addr %s346, 4
          %s348 = scalar_lea.hbm %s2, %s347
          %s350 = sshll.u32 %s340, 4
          %s351 = int_to_ptr.vmem [resolvable:$true] %s350
          %s352 = sshll.u32 %s348, 4
          %s353 = int_to_ptr.hbm [resolvable:$true] %s352
          %355 = dma.vmem_to_hbm [thread:$0]  %s351, 64, %s353, %s337
        $region32: #{tpu_custom_call.1} parent=27 // pred_fallthru
          _
      $region28: #{tpu_custom_call.1} parent=5 // pred_fallthru
        _
      %p356 = scmp.le.s32.totalorder 2, %s11
      // Predicated region
      $region33: #{tpu_custom_call.1} parent=5 // pred_check
        %p357 = pneg %p356
      $region34: #{tpu_custom_call.1} parent=5 // pred_check_branch
        %359 = sbr.rel (%p357) target = $region36
      $region35: #{tpu_custom_call.1} parent=5 // pred_region
        %s360 = ssub.s32 %s11, 2
        // Predicated region
        $region37: #{tpu_custom_call.1} parent=35 // pred_check
          %p361 = pneg %p108
        $region38: #{tpu_custom_call.1} parent=35 // pred_check_branch
          %363 = sbr.rel (%p361) target = $region40
        $region39: #{tpu_custom_call.1} parent=35 // pred_region
          %s364 = sand.u32 %s93, 1
          %s365 = scalar_lea.sflag [#allocation3], %s364
          %s366 = sand.u32 %s93, 1
          %s367 = smul.addr %s366, 4
          %s368 = scalar_lea.vmem [#allocation2], %s367
          %370 = dma.done %s365, 64
        $region40: #{tpu_custom_call.1} parent=35 // pred_fallthru
          _
      $region36: #{tpu_custom_call.1} parent=5 // pred_fallthru
        _
    $region6: #{tpu_custom_call.1} parent=1 // loop_footer
      %s15 = sadd.s32 1, %s11
    $region7: #{tpu_custom_call.1} parent=1 // loop_footer_branch
      %10 = sbr.rel target = $region3
    $region8: #{tpu_custom_call.1} parent=1 // loop_exit
      _
    %371 = vsyncpa [#allocation3], 1
    %s372 = scalar_lea.sflag [#allocation3], 1
    %373 = vsyncpa %s372, 1

</llo_original>
